<compile_context>
chip_gen: v7x
topology: tpu7x:2x2x1
jax: 0.10.0
libtpu: 0.0.40
codegen_flags: <defaults>
</compile_context>

<pallas_src>
import jax
import jax.numpy as jnp
from jax.experimental import pallas as pl
from jax.experimental.pallas import tpu as pltpu

# ---- small, module-consistent shapes --------------------------------------
B = 2                        # batch
CIN = 3                      # RGB input channels
H = W = 16                   # spatial (inception uses 299; scaled down)
K = 3                        # conv kernel size (Conv2d_1a_3x3 analogue)
HO, WO = H - K + 1, W - K + 1
NPOS = HO * WO               # conv output positions per image (196)
KKC = K * K * CIN            # im2col contraction dim (27)
FEAT = 128                   # surrogate fc.in_features (inception has 2048)
EMB = 64                     # embedding_size
DROP_P = 0.5
KEEP_SCALE = 1.0 / (1.0 - DROP_P)
# keep iff hashed-int32 >= this threshold  <=>  uniform u32 bits >= p * 2^32
DROP_THRESH_I32 = int(round(DROP_P * (1 << 32))) - (1 << 31)


def _dropout_keep(shape, seed, row):
    """Stateless Bernoulli(1 - p) keep mask.

    Counter-based hash of (seed, row, column) using only int32 add/xor/shift
    (each step is a bijection of the 32-bit space), then one integer compare.
    Portable: no TPU-only PRNG primitives, no float convert, no vector mul.
    """
    def lsr(v, k):  # logical right shift emulated with int32 ops
        return (v >> k) & jnp.int32((1 << (32 - k)) - 1)

    col = jax.lax.broadcasted_iota(jnp.int32, shape, len(shape) - 1)
    x = col + (row * jnp.int32(shape[-1]) + seed * jnp.int32(1103515245))
    for sl, sr, c in ((13, 17, -1640531527), (5, 11, 1013904223),
                      (7, 15, 374761393)):
        x = x + jnp.int32(c)
        x = x ^ (x << sl)
        x = x ^ lsr(x, sr)
    return x >= jnp.int32(DROP_THRESH_I32)


# ----------------------------------------------------------------------------
# Fused kernel (one image per grid step):
#   im2col-conv (MXU) -> folded BN -> ReLU -> global avg pool (XLU) ->
#   fc (MXU) + bias -> ReLU -> Dropout(0.5)
# ----------------------------------------------------------------------------
def cnn_fused_kernel(p_ref, wc_ref, g_ref, beta_ref, wf_ref, bf_ref, seed_ref,
                     o_ref):
    patches = p_ref[0]                                        # (NPOS, KKC)
    conv = jnp.dot(patches, wc_ref[...],
                   preferred_element_type=jnp.float32)        # (NPOS, FEAT)
    conv = jnp.maximum(conv * g_ref[...] + beta_ref[...], 0.0)    # BN + ReLU

    feats = jnp.mean(conv, axis=0, keepdims=True)             # (1, FEAT) GAP

    logits = jnp.dot(feats, wf_ref[...],
                     preferred_element_type=jnp.float32) + bf_ref[...]  # (1,EMB)
    act = jnp.maximum(logits, 0.0)                            # ReLU

    keep = _dropout_keep(act.shape, seed_ref[0], pl.program_id(0))
    o_ref[0] = jnp.where(keep, act * KEEP_SCALE, 0.0)         # Dropout(0.5)


# ----------------------------------------------------------------------------
# Wrapper
# ----------------------------------------------------------------------------
@jax.jit
def cnn_forward(x_nchw, params, seed):
    # im2col in the wrapper: folds the NCHW->NHWC transpose into the patch
    # gather (one XLA fusion) and leaves the kernel a single lane-friendly
    # (NPOS, KKC) matmul operand per image.
    x = jnp.transpose(x_nchw.astype(jnp.float32), (0, 2, 3, 1))     # NHWC
    cols = [x[:, ky:ky + HO, kx:kx + WO, :]
            for ky in range(K) for kx in range(K)]
    patches = jnp.concatenate(cols, axis=-1).reshape(B, NPOS, KKC)

    wc = params["conv_w"].reshape(KKC, FEAT)                  # HWIO -> (KKC,FEAT)
    seed_arr = jnp.asarray(seed, jnp.int32).reshape((1,))

    out = pl.pallas_call(
        cnn_fused_kernel,
        out_shape=jax.ShapeDtypeStruct((B, 1, EMB), jnp.float32),
        grid=(B,),
        in_specs=[
            pl.BlockSpec((1, NPOS, KKC), lambda b: (b, 0, 0)),   # patches
            pl.BlockSpec((KKC, FEAT), lambda b: (0, 0)),         # conv weight
            pl.BlockSpec((1, FEAT), lambda b: (0, 0)),           # BN scale
            pl.BlockSpec((1, FEAT), lambda b: (0, 0)),           # BN bias
            pl.BlockSpec((FEAT, EMB), lambda b: (0, 0)),         # fc weight
            pl.BlockSpec((1, EMB), lambda b: (0, 0)),            # fc bias
            pl.BlockSpec(memory_space=pltpu.MemorySpace.SMEM),   # dropout seed
        ],
        out_specs=pl.BlockSpec((1, 1, EMB), lambda b: (b, 0, 0)),
        compiler_params=pltpu.CompilerParams(
            dimension_semantics=("parallel",)),  # v7x: one image per TensorCore
    )(patches, wc, params["bn_scale"], params["bn_bias"],
      params["fc_w"], params["fc_b"], seed_arr)
    return out.reshape(B, EMB)


def init_params(key):
    k1, k2, k3 = jax.random.split(key, 3)
    return {
        # TODO(synk): pretrained inception_v3 weights are not loadable
        # in-script; the surrogate stem uses deterministic random weights.
        "conv_w": jax.random.normal(k1, (K, K, CIN, FEAT), jnp.float32) * 0.1,
        "bn_scale": jnp.ones((1, FEAT), jnp.float32),
        "bn_bias": jnp.zeros((1, FEAT), jnp.float32),
        "fc_w": jax.random.normal(k2, (FEAT, EMB), jnp.float32) * 0.05,
        "fc_b": jax.random.normal(k3, (1, EMB), jnp.float32) * 0.01,
    }


if __name__ == "__main__":
    key = jax.random.PRNGKey(0)
    kx, kp = jax.random.split(key)
    x = jax.random.normal(kx, (B, CIN, H, W), jnp.float32)    # NCHW like PyTorch
    params = init_params(kp)

    # NOTE: pass a fresh seed per call for a fresh dropout mask (PyTorch's
    # dropout RNG is stateful; ours is an explicit counter/seed).
    out = cnn_forward(x, params, 1234)
    out = jax.block_until_ready(out)
    assert out.shape == (B, EMB) and out.dtype == jnp.float32
    print("KERNEL_OK")
</pallas_src>

<mosaic_0001>
module attributes {stable_mosaic.version = 11 : i64} {
  func.func @cnn_fused_kernel(%arg0: i32, %arg1: memref<1x196x27xf32, #tpu.memory_space<vmem>>, %arg2: memref<27x128xf32, #tpu.memory_space<vmem>>, %arg3: memref<1x128xf32, #tpu.memory_space<vmem>>, %arg4: memref<1x128xf32, #tpu.memory_space<vmem>>, %arg5: memref<128x64xf32, #tpu.memory_space<vmem>>, %arg6: memref<1x64xf32, #tpu.memory_space<vmem>>, %arg7: memref<1xi32, #tpu.memory_space<smem>>, %arg8: memref<1x1x64xf32, #tpu.memory_space<vmem>>) attributes {dimension_semantics = [#tpu.dimension_semantics<parallel>], iteration_bounds = array<i64: 2>, scalar_prefetch = 0 : i64, scratch_operands = 0 : i64, tpu.core_type = #tpu.core_type<tc>, window_params = [{transform_indices = @transform_0, window_bounds = array<i64: 1, 196, 27>}, {pipeline_mode = #tpu.pipeline_mode<synchronous>, transform_indices = @transform_1, window_bounds = array<i64: 27, 128>}, {pipeline_mode = #tpu.pipeline_mode<synchronous>, transform_indices = @transform_2, window_bounds = array<i64: 1, 128>}, {pipeline_mode = #tpu.pipeline_mode<synchronous>, transform_indices = @transform_3, window_bounds = array<i64: 1, 128>}, {pipeline_mode = #tpu.pipeline_mode<synchronous>, transform_indices = @transform_4, window_bounds = array<i64: 128, 64>}, {pipeline_mode = #tpu.pipeline_mode<synchronous>, transform_indices = @transform_5, window_bounds = array<i64: 1, 64>}, {transform_indices = @transform_6, window_bounds = array<i64: 1>}, {transform_indices = @transform_7, window_bounds = array<i64: 1, 1, 64>}]} {
    %c0 = arith.constant 0 : index
    %c0_0 = arith.constant 0 : index
    %c0_1 = arith.constant 0 : index
    %0 = vector.load %arg1[%c0, %c0_0, %c0_1] : memref<1x196x27xf32, #tpu.memory_space<vmem>>, vector<1x196x27xf32>
    %1 = vector.shape_cast %0 : vector<1x196x27xf32> to vector<196x27xf32>
    %c0_2 = arith.constant 0 : index
    %c0_3 = arith.constant 0 : index
    %2 = vector.load %arg2[%c0_2, %c0_3] : memref<27x128xf32, #tpu.memory_space<vmem>>, vector<27x128xf32>
    %cst = arith.constant dense<0.000000e+00> : vector<196x128xf32>
    %3 = tpu.matmul %1, %2, %cst {dimension_numbers = #tpu.dot_dimension_numbers<[1], [0], [0], [1], [0, 0, 1, 1], [], []>} : vector<196x27xf32>, vector<27x128xf32>, vector<196x128xf32> -> vector<196x128xf32>
    %c0_4 = arith.constant 0 : index
    %c0_5 = arith.constant 0 : index
    %4 = vector.load %arg3[%c0_4, %c0_5] : memref<1x128xf32, #tpu.memory_space<vmem>>, vector<1x128xf32>
    %5 = vector.broadcast %4 : vector<1x128xf32> to vector<196x128xf32>
    %6 = arith.mulf %3, %5 : vector<196x128xf32>
    %c0_6 = arith.constant 0 : index
    %c0_7 = arith.constant 0 : index
    %7 = vector.load %arg4[%c0_6, %c0_7] : memref<1x128xf32, #tpu.memory_space<vmem>>, vector<1x128xf32>
    %8 = vector.broadcast %7 : vector<1x128xf32> to vector<196x128xf32>
    %9 = arith.addf %6, %8 : vector<196x128xf32>
    %cst_8 = arith.constant 0.000000e+00 : f32
    %10 = vector.broadcast %cst_8 : f32 to vector<196x128xf32>
    %11 = arith.maximumf %9, %10 : vector<196x128xf32>
    %cst_9 = arith.constant dense<0.000000e+00> : vector<128xf32>
    %12 = vector.multi_reduction <add>, %11, %cst_9 [0] : vector<196x128xf32> to vector<128xf32>
    %13 = vector.shape_cast %12 : vector<128xf32> to vector<1x128xf32>
    %cst_10 = arith.constant 1.960000e+02 : f32
    %14 = vector.broadcast %cst_10 : f32 to vector<1x128xf32>
    %15 = arith.divf %13, %14 : vector<1x128xf32>
    %c0_11 = arith.constant 0 : index
    %c0_12 = arith.constant 0 : index
    %16 = vector.load %arg5[%c0_11, %c0_12] : memref<128x64xf32, #tpu.memory_space<vmem>>, vector<128x64xf32>
    %cst_13 = arith.constant dense<0.000000e+00> : vector<1x64xf32>
    %17 = tpu.matmul %15, %16, %cst_13 {dimension_numbers = #tpu.dot_dimension_numbers<[1], [0], [0], [1], [0, 0, 1, 1], [], []>} : vector<1x128xf32>, vector<128x64xf32>, vector<1x64xf32> -> vector<1x64xf32>
    %c0_14 = arith.constant 0 : index
    %c0_15 = arith.constant 0 : index
    %18 = vector.load %arg6[%c0_14, %c0_15] : memref<1x64xf32, #tpu.memory_space<vmem>>, vector<1x64xf32>
    %19 = arith.addf %17, %18 : vector<1x64xf32>
    %cst_16 = arith.constant 0.000000e+00 : f32
    %20 = vector.broadcast %cst_16 : f32 to vector<1x64xf32>
    %21 = arith.maximumf %19, %20 : vector<1x64xf32>
    %c0_17 = arith.constant 0 : index
    %22 = memref.load %arg7[%c0_17] : memref<1xi32, #tpu.memory_space<smem>>
    %23 = tpu.iota {dimensions = array<i32: 1>} : vector<1x64xi32>
    %c64_i32 = arith.constant 64 : i32
    %24 = arith.muli %arg0, %c64_i32 : i32
    %c1103515245_i32 = arith.constant 1103515245 : i32
    %25 = arith.muli %22, %c1103515245_i32 : i32
    %26 = arith.addi %24, %25 : i32
    %27 = vector.broadcast %26 : i32 to vector<1x64xi32>
    %28 = arith.addi %23, %27 : vector<1x64xi32>
    %c-1640531527_i32 = arith.constant -1640531527 : i32
    %29 = vector.broadcast %c-1640531527_i32 : i32 to vector<1x64xi32>
    %30 = arith.addi %28, %29 : vector<1x64xi32>
    %c13_i32 = arith.constant 13 : i32
    %31 = vector.broadcast %c13_i32 : i32 to vector<1x64xi32>
    %32 = arith.shli %30, %31 : vector<1x64xi32>
    %33 = arith.xori %30, %32 : vector<1x64xi32>
    %c17_i32 = arith.constant 17 : i32
    %34 = vector.broadcast %c17_i32 : i32 to vector<1x64xi32>
    %35 = arith.shrsi %33, %34 : vector<1x64xi32>
    %c32767_i32 = arith.constant 32767 : i32
    %36 = vector.broadcast %c32767_i32 : i32 to vector<1x64xi32>
    %37 = arith.andi %35, %36 : vector<1x64xi32>
    %38 = arith.xori %33, %37 : vector<1x64xi32>
    %c1013904223_i32 = arith.constant 1013904223 : i32
    %39 = vector.broadcast %c1013904223_i32 : i32 to vector<1x64xi32>
    %40 = arith.addi %38, %39 : vector<1x64xi32>
    %c5_i32 = arith.constant 5 : i32
    %41 = vector.broadcast %c5_i32 : i32 to vector<1x64xi32>
    %42 = arith.shli %40, %41 : vector<1x64xi32>
    %43 = arith.xori %40, %42 : vector<1x64xi32>
    %c11_i32 = arith.constant 11 : i32
    %44 = vector.broadcast %c11_i32 : i32 to vector<1x64xi32>
    %45 = arith.shrsi %43, %44 : vector<1x64xi32>
    %c2097151_i32 = arith.constant 2097151 : i32
    %46 = vector.broadcast %c2097151_i32 : i32 to vector<1x64xi32>
    %47 = arith.andi %45, %46 : vector<1x64xi32>
    %48 = arith.xori %43, %47 : vector<1x64xi32>
    %c374761393_i32 = arith.constant 374761393 : i32
    %49 = vector.broadcast %c374761393_i32 : i32 to vector<1x64xi32>
    %50 = arith.addi %48, %49 : vector<1x64xi32>
    %c7_i32 = arith.constant 7 : i32
    %51 = vector.broadcast %c7_i32 : i32 to vector<1x64xi32>
    %52 = arith.shli %50, %51 : vector<1x64xi32>
    %53 = arith.xori %50, %52 : vector<1x64xi32>
    %c15_i32 = arith.constant 15 : i32
    %54 = vector.broadcast %c15_i32 : i32 to vector<1x64xi32>
    %55 = arith.shrsi %53, %54 : vector<1x64xi32>
    %c131071_i32 = arith.constant 131071 : i32
    %56 = vector.broadcast %c131071_i32 : i32 to vector<1x64xi32>
    %57 = arith.andi %55, %56 : vector<1x64xi32>
    %58 = arith.xori %53, %57 : vector<1x64xi32>
    %c0_i32 = arith.constant 0 : i32
    %59 = vector.broadcast %c0_i32 : i32 to vector<1x64xi32>
    %60 = arith.cmpi sge, %58, %59 : vector<1x64xi32>
    %cst_18 = arith.constant 2.000000e+00 : f32
    %61 = vector.broadcast %cst_18 : f32 to vector<1x64xf32>
    %62 = arith.mulf %21, %61 : vector<1x64xf32>
    %cst_19 = arith.constant 0.000000e+00 : f32
    %63 = vector.broadcast %cst_19 : f32 to vector<1x64xf32>
    %64 = arith.select %60, %62, %63 : vector<1x64xi1>, vector<1x64xf32>
    %c0_20 = arith.constant 0 : index
    %c0_21 = arith.constant 0 : index
    %c0_22 = arith.constant 0 : index
    %65 = vector.load %arg8[%c0_20, %c0_21, %c0_22] : memref<1x1x64xf32, #tpu.memory_space<vmem>>, vector<1x1x64xf32>
    %66 = vector.shape_cast %65 : vector<1x1x64xf32> to vector<1x64xf32>
    %67 = vector.shape_cast %64 : vector<1x64xf32> to vector<1x1x64xf32>
    tpu.vector_store %arg8[%c0_20, %c0_21, %c0_22], %67 {strides = array<i32>} : memref<1x1x64xf32, #tpu.memory_space<vmem>>, vector<1x1x64xf32>,
    return
  }
  func.func @transform_0(%arg0: i32) -> (i32, i32, i32) {
    %c0_i32 = arith.constant 0 : i32
    %c0_i32_0 = arith.constant 0 : i32
    %c0_i32_1 = arith.constant 0 : i32
    return %arg0, %c0_i32, %c0_i32_0 : i32, i32, i32
  }
  func.func @transform_1(%arg0: i32) -> (i32, i32) {
    %c0_i32 = arith.constant 0 : i32
    %c0_i32_0 = arith.constant 0 : i32
    %c0_i32_1 = arith.constant 0 : i32
    return %c0_i32, %c0_i32_0 : i32, i32
  }
  func.func @transform_2(%arg0: i32) -> (i32, i32) {
    %c0_i32 = arith.constant 0 : i32
    %c0_i32_0 = arith.constant 0 : i32
    %c0_i32_1 = arith.constant 0 : i32
    return %c0_i32, %c0_i32_0 : i32, i32
  }
  func.func @transform_3(%arg0: i32) -> (i32, i32) {
    %c0_i32 = arith.constant 0 : i32
    %c0_i32_0 = arith.constant 0 : i32
    %c0_i32_1 = arith.constant 0 : i32
    return %c0_i32, %c0_i32_0 : i32, i32
  }
  func.func @transform_4(%arg0: i32) -> (i32, i32) {
    %c0_i32 = arith.constant 0 : i32
    %c0_i32_0 = arith.constant 0 : i32
    %c0_i32_1 = arith.constant 0 : i32
    return %c0_i32, %c0_i32_0 : i32, i32
  }
  func.func @transform_5(%arg0: i32) -> (i32, i32) {
    %c0_i32 = arith.constant 0 : i32
    %c0_i32_0 = arith.constant 0 : i32
    %c0_i32_1 = arith.constant 0 : i32
    return %c0_i32, %c0_i32_0 : i32, i32
  }
  func.func @transform_6(%arg0: i32) -> i32 {
    %c0_i32 = arith.constant 0 : i32
    %c0_i32_0 = arith.constant 0 : i32
    return %c0_i32 : i32
  }
  func.func @transform_7(%arg0: i32) -> (i32, i32, i32) {
    %c0_i32 = arith.constant 0 : i32
    %c0_i32_0 = arith.constant 0 : i32
    %c0_i32_1 = arith.constant 0 : i32
    return %arg0, %c0_i32, %c0_i32_0 : i32, i32, i32
  }
}

</mosaic_0001>

<llo_original>
// kernel: cnn_forward.1
$region0: #{cnn_forward.1}
  #allocation0 [shape = 'u32[]', space=smem, size = 0x4, offset = 0x4, fixed_abs, tag = 'smem constant byte address 0x4 - core index']
  #allocation1 [shape = 'u32[144,128]{1,0:T(1,128)}', space=vmem, size = 0x12000, scoped, tag = 'internal scratch']
  #allocation2 [shape = 's32[1]{0:T(128)S(6)}', space=smem, size = 0x200, scoped, tag = 'scoped memory for cnn_forward.1']
  %s0 = inlined_call_operand.vmem [shape: f32[2,196,27], index: 0, kind: input, shape index: {}]
  %s1 = inlined_call_operand.vmem [shape: f32[27,128], index: 1, kind: input, shape index: {}]
  %s2 = inlined_call_operand.vmem [shape: f32[1,128], index: 2, kind: input, shape index: {}]
  %s3 = inlined_call_operand.vmem [shape: f32[1,128], index: 3, kind: input, shape index: {}]
  %s4 = inlined_call_operand.vmem [shape: f32[128,64], index: 4, kind: input, shape index: {}]
  %s5 = inlined_call_operand.vmem [shape: f32[1,64], index: 5, kind: input, shape index: {}]
  %s6 = inlined_call_operand.<no memory space> [shape: s32[1], index: 6, kind: input, shape index: {}]
  %s7 = inlined_call_operand.hbm [shape: f32[2,1,64], index: 7, kind: output, shape index: {}]
  %s8 = sld [smem:[#allocation0]]
  $region61: #{cnn_forward.1} parent=0
    _
  %s10 = ssub.s32 1, %s8
  %s11 = scalar_select 0, %s10, %s8
  %12 = sst [smem:[#allocation2]] %s6
  $region1: #{cnn_forward.1} parent=0
    #allocation3 [shape = 'u8[1024]{0}', space=vmem, size = 0x400, scoped, tag = 'output window, operand 0']
    #allocation4 [shape = 's32[2]{0}', space=sflag, size = 0x8, scoped, tag = 'scoped memory for cnn_forward.1']
    %13 = vsyncpa [#allocation4], 0
    %s14 = scalar_lea.sflag [#allocation4], 1
    %15 = vsyncpa %s14, 0
    loop: start=0, step=1, limit=4
    $region2: #{cnn_forward.1} parent=1 // loop_pre_header
      _
    $region3: #{cnn_forward.1} parent=1 // loop_header
      %s17 = sphi 0, %s21
      %p18 = scmp.ge.s32.totalorder %s17, 4
      %s27 = sphi 0, %s29
      %s30 = sphi 0, %s27
      %s31 = sphi 0, %s30
      %s47 = sphi 0, %s31
      %s51 = sphi 0, %s51
      %s53 = sphi 0, %s51
      %s54 = sphi 0, %s53
      %s68 = sphi 0, %s54
      %s72 = sphi 0, %s72
      %s74 = sphi 0, %s72
      %s75 = sphi 0, %s74
      %s89 = sphi 0, %s75
      %s93 = sphi 0, %s93
      %s95 = sphi 0, %s93
      %s96 = sphi 0, %s95
      %s110 = sphi 0, %s96
      %s114 = sphi 0, %s114
      %s116 = sphi 0, %s114
      %s117 = sphi 0, %s116
      %s131 = sphi 0, %s117
      %s135 = sphi 0, %s135
      %s137 = sphi 0, %s135
      %s138 = sphi 0, %s137
      %s152 = sphi 0, %s138
      %s156 = sphi 0, %s156
      %s158 = sphi 0, %s156
      %s159 = sphi 0, %s158
      %s173 = sphi 0, %s159
      %s179 = sphi 0, %s181
      %s182 = sphi 0, %s179
      %s183 = sphi 0, %s182
      %s199 = sphi 0, %s183
    $region4: #{cnn_forward.1} parent=1 // loop_header_branch
      %20 = sbr.rel (%p18) target = $region8
    $region5: #{cnn_forward.1} parent=1 // loop_body
      %s22 = ssub.s32 %s17, 1
      %s23 = ssub.s32 %s17, 2
      %s24 = sadd.s32 %s17, 1
      %s25 = ssub.s32 %s17, %s24
      %p26 = scmp.eq.s32.totalorder %s25, 0
      %s28 = sadd.s32 %s27, 1
      %s29 = scalar_select %p26, %s27, %s28
      %p32 = pneg %p26
      %p33 = scmp.eq.s32.totalorder %s17, 1
      %p34 = por %p32, %p33
      %p35 = scmp.ne.s32.totalorder %s27, %s30
      %p36 = scmp.eq.s32.totalorder %s17, 0
      %p37 = por %p35, %p36
      %p38 = scmp.ne.s32.totalorder %s27, %s30
      %p39 = scmp.eq.s32.totalorder %s22, 1
      %p40 = por %p38, %p39
      %p41 = scmp.ne.s32.totalorder %s30, %s31
      %p42 = scmp.eq.s32.totalorder %s22, 0
      %p43 = por %p41, %p42
      %p44 = scmp.ne.s32.totalorder %s30, %s31
      %p45 = scmp.eq.s32.totalorder %s23, 1
      %p46 = por %p44, %p45
      %p48 = scmp.ne.s32.totalorder %s31, %s47
      %p49 = scmp.eq.s32.totalorder %s23, 0
      %p50 = por %p48, %p49
      %s52 = sadd.s32 %s51, 1
      %p55 = scmp.eq.s32.totalorder %s17, 1
      %p56 = scmp.ne.s32.totalorder %s51, %s53
      %p57 = scmp.eq.s32.totalorder %s17, 0
      %p58 = por %p56, %p57
      %p59 = scmp.ne.s32.totalorder %s51, %s53
      %p60 = scmp.eq.s32.totalorder %s22, 1
      %p61 = por %p59, %p60
      %p62 = scmp.ne.s32.totalorder %s53, %s54
      %p63 = scmp.eq.s32.totalorder %s22, 0
      %p64 = por %p62, %p63
      %p65 = scmp.ne.s32.totalorder %s53, %s54
      %p66 = scmp.eq.s32.totalorder %s23, 1
      %p67 = por %p65, %p66
      %p69 = scmp.ne.s32.totalorder %s54, %s68
      %p70 = scmp.eq.s32.totalorder %s23, 0
      %p71 = por %p69, %p70
      %s73 = sadd.s32 %s72, 1
      %p76 = scmp.eq.s32.totalorder %s17, 1
      %p77 = scmp.ne.s32.totalorder %s72, %s74
      %p78 = scmp.eq.s32.totalorder %s17, 0
      %p79 = por %p77, %p78
      %p80 = scmp.ne.s32.totalorder %s72, %s74
      %p81 = scmp.eq.s32.totalorder %s22, 1
      %p82 = por %p80, %p81
      %p83 = scmp.ne.s32.totalorder %s74, %s75
      %p84 = scmp.eq.s32.totalorder %s22, 0
      %p85 = por %p83, %p84
      %p86 = scmp.ne.s32.totalorder %s74, %s75
      %p87 = scmp.eq.s32.totalorder %s23, 1
      %p88 = por %p86, %p87
      %p90 = scmp.ne.s32.totalorder %s75, %s89
      %p91 = scmp.eq.s32.totalorder %s23, 0
      %p92 = por %p90, %p91
      %s94 = sadd.s32 %s93, 1
      %p97 = scmp.eq.s32.totalorder %s17, 1
      %p98 = scmp.ne.s32.totalorder %s93, %s95
      %p99 = scmp.eq.s32.totalorder %s17, 0
      %p100 = por %p98, %p99
      %p101 = scmp.ne.s32.totalorder %s93, %s95
      %p102 = scmp.eq.s32.totalorder %s22, 1
      %p103 = por %p101, %p102
      %p104 = scmp.ne.s32.totalorder %s95, %s96
      %p105 = scmp.eq.s32.totalorder %s22, 0
      %p106 = por %p104, %p105
      %p107 = scmp.ne.s32.totalorder %s95, %s96
      %p108 = scmp.eq.s32.totalorder %s23, 1
      %p109 = por %p107, %p108
      %p111 = scmp.ne.s32.totalorder %s96, %s110
      %p112 = scmp.eq.s32.totalorder %s23, 0
      %p113 = por %p111, %p112
      %s115 = sadd.s32 %s114, 1
      %p118 = scmp.eq.s32.totalorder %s17, 1
      %p119 = scmp.ne.s32.totalorder %s114, %s116
      %p120 = scmp.eq.s32.totalorder %s17, 0
      %p121 = por %p119, %p120
      %p122 = scmp.ne.s32.totalorder %s114, %s116
      %p123 = scmp.eq.s32.totalorder %s22, 1
      %p124 = por %p122, %p123
      %p125 = scmp.ne.s32.totalorder %s116, %s117
      %p126 = scmp.eq.s32.totalorder %s22, 0
      %p127 = por %p125, %p126
      %p128 = scmp.ne.s32.totalorder %s116, %s117
      %p129 = scmp.eq.s32.totalorder %s23, 1
      %p130 = por %p128, %p129
      %p132 = scmp.ne.s32.totalorder %s117, %s131
      %p133 = scmp.eq.s32.totalorder %s23, 0
      %p134 = por %p132, %p133
      %s136 = sadd.s32 %s135, 1
      %p139 = scmp.eq.s32.totalorder %s17, 1
      %p140 = scmp.ne.s32.totalorder %s135, %s137
      %p141 = scmp.eq.s32.totalorder %s17, 0
      %p142 = por %p140, %p141
      %p143 = scmp.ne.s32.totalorder %s135, %s137
      %p144 = scmp.eq.s32.totalorder %s22, 1
      %p145 = por %p143, %p144
      %p146 = scmp.ne.s32.totalorder %s137, %s138
      %p147 = scmp.eq.s32.totalorder %s22, 0
      %p148 = por %p146, %p147
      %p149 = scmp.ne.s32.totalorder %s137, %s138
      %p150 = scmp.eq.s32.totalorder %s23, 1
      %p151 = por %p149, %p150
      %p153 = scmp.ne.s32.totalorder %s138, %s152
      %p154 = scmp.eq.s32.totalorder %s23, 0
      %p155 = por %p153, %p154
      %s157 = sadd.s32 %s156, 1
      %p160 = scmp.eq.s32.totalorder %s17, 1
      %p161 = scmp.ne.s32.totalorder %s156, %s158
      %p162 = scmp.eq.s32.totalorder %s17, 0
      %p163 = por %p161, %p162
      %p164 = scmp.ne.s32.totalorder %s156, %s158
      %p165 = scmp.eq.s32.totalorder %s22, 1
      %p166 = por %p164, %p165
      %p167 = scmp.ne.s32.totalorder %s158, %s159
      %p168 = scmp.eq.s32.totalorder %s22, 0
      %p169 = por %p167, %p168
      %p170 = scmp.ne.s32.totalorder %s158, %s159
      %p171 = scmp.eq.s32.totalorder %s23, 1
      %p172 = por %p170, %p171
      %p174 = scmp.ne.s32.totalorder %s159, %s173
      %p175 = scmp.eq.s32.totalorder %s23, 0
      %p176 = por %p174, %p175
      %s177 = ssub.s32 %s17, %s24
      %p178 = scmp.eq.s32.totalorder %s177, 0
      %s180 = sadd.s32 %s179, 1
      %s181 = scalar_select %p178, %s179, %s180
      %p184 = pneg %p178
      %p185 = scmp.eq.s32.totalorder %s17, 1
      %p186 = por %p184, %p185
      %p187 = scmp.ne.s32.totalorder %s179, %s182
      %p188 = scmp.eq.s32.totalorder %s17, 0
      %p189 = por %p187, %p188
      %p190 = scmp.ne.s32.totalorder %s179, %s182
      %p191 = scmp.eq.s32.totalorder %s22, 1
      %p192 = por %p190, %p191
      %p193 = scmp.ne.s32.totalorder %s182, %s183
      %p194 = scmp.eq.s32.totalorder %s22, 0
      %p195 = por %p193, %p194
      %p196 = scmp.ne.s32.totalorder %s182, %s183
      %p197 = scmp.eq.s32.totalorder %s23, 1
      %p198 = por %p196, %p197
      %p200 = scmp.ne.s32.totalorder %s183, %s199
      %p201 = scmp.eq.s32.totalorder %s23, 0
      %p202 = por %p200, %p201
      %p203 = scmp.le.s32.totalorder 1, %s17
      %p204 = scmp.lt.s32.totalorder %s17, 3
      %p205 = pnand %p203, %p204
      %p206 = pneg %p205
      // Predicated region
      $region9: #{cnn_forward.1} parent=5 // pred_check
        _
      $region10: #{cnn_forward.1} parent=5 // pred_check_branch
        %208 = sbr.rel (%p205) target = $region12
      $region11: #{cnn_forward.1} parent=5 // pred_region
        %s209 = ssub.s32 %s17, 1
        // Predicated region
        $region13: #{cnn_forward.1} parent=11 // pred_check
          %p210 = pneg %p64
        $region14: #{cnn_forward.1} parent=11 // pred_check_branch
          %212 = sbr.rel (%p210) target = $region16
        $region15: #{cnn_forward.1} parent=11 // pred_region
          _
        $region16: #{cnn_forward.1} parent=11 // pred_fallthru
          _
        // Predicated region
        $region17: #{cnn_forward.1} parent=11 // pred_check
          %p213 = pneg %p85
        $region18: #{cnn_forward.1} parent=11 // pred_check_branch
          %215 = sbr.rel (%p213) target = $region20
        $region19: #{cnn_forward.1} parent=11 // pred_region
          _
        $region20: #{cnn_forward.1} parent=11 // pred_fallthru
          _
        // Predicated region
        $region21: #{cnn_forward.1} parent=11 // pred_check
          %p216 = pneg %p106
        $region22: #{cnn_forward.1} parent=11 // pred_check_branch
          %218 = sbr.rel (%p216) target = $region24
        $region23: #{cnn_forward.1} parent=11 // pred_region
          _
        $region24: #{cnn_forward.1} parent=11 // pred_fallthru
          _
        // Predicated region
        $region25: #{cnn_forward.1} parent=11 // pred_check
          %p219 = pneg %p127
        $region26: #{cnn_forward.1} parent=11 // pred_check_branch
          %221 = sbr.rel (%p219) target = $region28
        $region27: #{cnn_forward.1} parent=11 // pred_region
          _
        $region28: #{cnn_forward.1} parent=11 // pred_fallthru
          _
        // Predicated region
        $region29: #{cnn_forward.1} parent=11 // pred_check
          %p222 = pneg %p148
        $region30: #{cnn_forward.1} parent=11 // pred_check_branch
          %224 = sbr.rel (%p222) target = $region32
        $region31: #{cnn_forward.1} parent=11 // pred_region
          _
        $region32: #{cnn_forward.1} parent=11 // pred_fallthru
          _
        // Predicated region
        $region33: #{cnn_forward.1} parent=11 // pred_check
          %p225 = pneg %p169
        $region34: #{cnn_forward.1} parent=11 // pred_check_branch
          %227 = sbr.rel (%p225) target = $region36
        $region35: #{cnn_forward.1} parent=11 // pred_region
          _
        $region36: #{cnn_forward.1} parent=11 // pred_fallthru
          _
      $region12: #{cnn_forward.1} parent=5 // pred_fallthru
        _
      %p228 = scmp.lt.s32.totalorder %s17, 2
      // Predicated region
      $region37: #{cnn_forward.1} parent=5 // pred_check
        %p229 = pneg %p228
      $region38: #{cnn_forward.1} parent=5 // pred_check_branch
        %231 = sbr.rel (%p229) target = $region40
      $region39: #{cnn_forward.1} parent=5 // pred_region
        // Predicated region
        $region41: #{cnn_forward.1} parent=39 // pred_check
          %p232 = pneg %p37
        $region42: #{cnn_forward.1} parent=39 // pred_check_branch
          %234 = sbr.rel (%p232) target = $region44
        $region43: #{cnn_forward.1} parent=39 // pred_region
          %p235 = scmp.lt.s32.totalorder %s17, 1
          %s236 = scalar_select %p235, %s17, 1
          %s237 = smul.addr %s236, 25
          %s238 = smul.addr %s237, 8
          %s239 = scalar_lea.vmem %s0, %s238
        $region44: #{cnn_forward.1} parent=39 // pred_fallthru
          _
      $region40: #{cnn_forward.1} parent=5 // pred_fallthru
        _
      %p240 = scmp.le.s32.totalorder 1, %s17
      %p241 = scmp.lt.s32.totalorder %s17, 3
      %p242 = pnand %p240, %p241
      %p243 = pneg %p242
      // Predicated region
      $region45: #{cnn_forward.1} parent=5 // pred_check
        _
      $region46: #{cnn_forward.1} parent=5 // pred_check_branch
        %245 = sbr.rel (%p242) target = $region48
      $region47: #{cnn_forward.1} parent=5 // pred_region
        %s246 = ssub.s32 %s17, 1
        %p247 = scmp.lt.s32.totalorder %s22, 1
        %s248 = scalar_select %p247, %s22, 1
        %s249 = smul.addr %s248, 25
        %s250 = smul.addr %s249, 8
        %s251 = scalar_lea.vmem %s0, %s250
        %p252 = pneg %p43
        %p253 = pneg %p40
        %p254 = pneg %p64
        %p255 = pneg %p61
        %p256 = pneg %p85
        %p257 = pneg %p82
        %p258 = pneg %p106
        %p259 = pneg %p103
        %p260 = pneg %p127
        %p261 = pneg %p124
        %p262 = pneg %p148
        %p263 = pneg %p145
        %p264 = pneg %p169
        %p265 = pneg %p166
        %p266 = pneg %p195
        %p267 = pneg %p192
        %s268 = sand.u32 %s182, 1
        %s269 = scalar_lea.sflag [#allocation4], %s268
        %s270 = sand.u32 %s182, 1
        %s271 = scalar_lea.vmem [#allocation3], %s270
        %p272 = scmp.lt.s32.totalorder %s22, 1
        %s273 = scalar_select %p272, %s22, 1
        %s274 = smul.addr %s273, 25
        %s275 = smul.addr %s274, 8
        %s276 = scalar_lea.vmem %s0, %s275
        %v277 = vld [vmem:[%s276] sm:$0xff]
        %v278 = vld [vmem:[%s276 + $0x8] sm:$0xff]
        %v279 = vld [vmem:[%s276 + $0x10] sm:$0xff]
        %v280 = vld [vmem:[%s276 + $0x18] sm:$0xff]
        %v281 = vld [vmem:[%s276 + $0x20] sm:$0xff]
        %v282 = vld [vmem:[%s276 + $0x28] sm:$0xff]
        %v283 = vld [vmem:[%s276 + $0x30] sm:$0xff]
        %v284 = vld [vmem:[%s276 + $0x38] sm:$0xff]
        %v285 = vld [vmem:[%s276 + $0x40] sm:$0xff]
        %v286 = vld [vmem:[%s276 + $0x48] sm:$0xff]
        %v287 = vld [vmem:[%s276 + $0x50] sm:$0xff]
        %v288 = vld [vmem:[%s276 + $0x58] sm:$0xff]
        %v289 = vld [vmem:[%s276 + $0x60] sm:$0xff]
        %v290 = vld [vmem:[%s276 + $0x68] sm:$0xff]
        %v291 = vld [vmem:[%s276 + $0x70] sm:$0xff]
        %v292 = vld [vmem:[%s276 + $0x78] sm:$0xff]
        %v293 = vld [vmem:[%s276 + $0x80] sm:$0xff]
        %v294 = vld [vmem:[%s276 + $0x88] sm:$0xff]
        %v295 = vld [vmem:[%s276 + $0x90] sm:$0xff]
        %v296 = vld [vmem:[%s276 + $0x98] sm:$0xff]
        %v297 = vld [vmem:[%s276 + $0xa0] sm:$0xff]
        %v298 = vld [vmem:[%s276 + $0xa8] sm:$0xff]
        %v299 = vld [vmem:[%s276 + $0xb0] sm:$0xff]
        %v300 = vld [vmem:[%s276 + $0xb8] sm:$0xff]
        %v301 = vld [vmem:[%s276 + $0xc0] sm:$0xf]
        %v302 = vld [vmem:[%s1] sm:$0xff]
        %v303 = vld [vmem:[%s1 + $0x8] sm:$0xff]
        %v304 = vld [vmem:[%s1 + $0x10] sm:$0xff]
        %v305 = vld [vmem:[%s1 + $0x18] sm:$0x7]
        %vm306 = vcmask 220160
        %v308 = vsel %vm306, %v277, 0
        %v311 = vsel %vm306, %v278, 0
        %v314 = vsel %vm306, %v279, 0
        %v317 = vsel %vm306, %v280, 0
        %v320 = vsel %vm306, %v281, 0
        %v323 = vsel %vm306, %v282, 0
        %v326 = vsel %vm306, %v283, 0
        %v329 = vsel %vm306, %v284, 0
        %v332 = vsel %vm306, %v285, 0
        %v335 = vsel %vm306, %v286, 0
        %v338 = vsel %vm306, %v287, 0
        %v341 = vsel %vm306, %v288, 0
        %v344 = vsel %vm306, %v289, 0
        %v347 = vsel %vm306, %v290, 0
        %v350 = vsel %vm306, %v291, 0
        %v353 = vsel %vm306, %v292, 0
        %v356 = vsel %vm306, %v293, 0
        %v359 = vsel %vm306, %v294, 0
        %v362 = vsel %vm306, %v295, 0
        %v365 = vsel %vm306, %v296, 0
        %v368 = vsel %vm306, %v297, 0
        %v371 = vsel %vm306, %v298, 0
        %v374 = vsel %vm306, %v299, 0
        %v377 = vsel %vm306, %v300, 0
        %v380 = vsel %vm306, %v301, 0
        %vm382 = vcmask 1042432
        %v384 = vsel %vm382, %v305, 0
        %386 = vmatprep.subr.mxu0 0.0
        %387 = vmatpush1.msra.mxu0 %v302
        %388 = vmatprep.subr.mxu0 0.0
        %389 = vmatpush1.msra.mxu0 %v303
        %390 = vmatprep.subr.mxu0 0.0
        %391 = vmatpush1.msra.mxu0 %v304
        %392 = vmatprep.subr.mxu0 0.0
        %393 = vmatpush1.msra.mxu0 %v384
        %394 = vmatprep.subr.mxu0 0.0
        %395 = vmatpush1.msra.mxu0 0.0
        %396 = vmatprep.subr.mxu0 0.0
        %397 = vmatpush1.msra.mxu0 0.0
        %398 = vmatprep.subr.mxu0 0.0
        %399 = vmatpush1.msra.mxu0 0.0
        %400 = vmatprep.subr.mxu0 0.0
        %401 = vmatpush1.msra.mxu0 0.0
        %402 = vmatprep.subr.mxu0 0.0
        %403 = vmatpush1.msra.mxu0 0.0
        %404 = vmatprep.subr.mxu0 0.0
        %405 = vmatpush1.msra.mxu0 0.0
        %406 = vmatprep.subr.mxu0 0.0
        %407 = vmatpush1.msra.mxu0 0.0
        %408 = vmatprep.subr.mxu0 0.0
        %409 = vmatpush1.msra.mxu0 0.0
        %410 = vmatprep.subr.mxu0 0.0
        %411 = vmatpush1.msra.mxu0 0.0
        %412 = vmatprep.subr.mxu0 0.0
        %413 = vmatpush1.msra.mxu0 0.0
        %414 = vmatprep.subr.mxu0 0.0
        %415 = vmatpush1.msra.mxu0 0.0
        %416 = vmatprep.subr.mxu0 0.0
        %417 = vmatpush1.msra.mxu0 0.0
        %418 = vmatprep.subr.mxu0 0.0
        %419 = vmatpush1.msra.mxu0 0.0
        %420 = vmatprep.subr.mxu0 0.0
        %421 = vmatpush1.msra.mxu0 0.0
        %422 = vmatprep.subr.mxu0 0.0
        %423 = vmatpush1.msra.mxu0 0.0
        %424 = vmatprep.subr.mxu0 0.0
        %425 = vmatpush1.msra.mxu0 0.0
        %426 = vmatprep.subr.mxu0 0.0
        %427 = vmatpush1.msra.mxu0 0.0
        %428 = vmatprep.subr.mxu0 0.0
        %429 = vmatpush1.msra.mxu0 0.0
        %430 = vmatprep.subr.mxu0 0.0
        %431 = vmatpush1.msra.mxu0 0.0
        %432 = vmatprep.subr.mxu0 0.0
        %433 = vmatpush1.msra.mxu0 0.0
        %434 = vmatprep.subr.mxu0 0.0
        %435 = vmatpush1.msra.mxu0 0.0
        %436 = vmatprep.subr.mxu0 0.0
        %437 = vmatpush1.msra.mxu0 0.0
        %438 = vmatprep.subr.mxu0 0.0
        %439 = vmatpush1.msra.mxu0 0.0
        %440 = vmatprep.subr.mxu0 0.0
        %441 = vmatpush1.msra.mxu0 0.0
        %442 = vmatprep.subr.mxu0 0.0
        %443 = vmatpush1.msra.mxu0 0.0
        %444 = vmatprep.subr.mxu0 0.0
        %445 = vmatpush1.msra.mxu0 0.0
        %446 = vmatprep.subr.mxu0 0.0
        %447 = vmatpush1.msra.mxu0 0.0
        %448 = vmatprep.subr.mxu0 0.0
        %449 = vmatpush1.msra.mxu0 0.0
        %450 = vmatprep.mubr.f32.mxu0 0.0
        %451 = vmatmul.mubr.f32.gmra.mrb[0].mxu0 %v308
        %v452 = vpop.f32.mrb[0].mxu0
        %v453 = vadd.f32 0.0, %v452
        %v454 = vpop.f32.mrb[0].mxu0
        %455 = vmatprep.mubr.f32.mxu0 0.0
        %456 = vmatmul.mubr.f32.gmra.mrb[0].mxu0 %v311
        %v457 = vpop.f32.mrb[0].mxu0
        %v458 = vadd.f32 0.0, %v457
        %v459 = vpop.f32.mrb[0].mxu0
        %460 = vmatprep.mubr.f32.mxu0 0.0
        %461 = vmatmul.mubr.f32.gmra.mrb[0].mxu0 %v314
        %v462 = vpop.f32.mrb[0].mxu0
        %v463 = vadd.f32 0.0, %v462
        %v464 = vpop.f32.mrb[0].mxu0
        %465 = vmatprep.mubr.f32.mxu0 0.0
        %466 = vmatmul.mubr.f32.gmra.mrb[0].mxu0 %v317
        %v467 = vpop.f32.mrb[0].mxu0
        %v468 = vadd.f32 0.0, %v467
        %v469 = vpop.f32.mrb[0].mxu0
        %470 = vmatprep.mubr.f32.mxu0 0.0
        %471 = vmatmul.mubr.f32.gmra.mrb[0].mxu0 %v320
        %v472 = vpop.f32.mrb[0].mxu0
        %v473 = vadd.f32 0.0, %v472
        %v474 = vpop.f32.mrb[0].mxu0
        %475 = vmatprep.mubr.f32.mxu0 0.0
        %476 = vmatmul.mubr.f32.gmra.mrb[0].mxu0 %v323
        %v477 = vpop.f32.mrb[0].mxu0
        %v478 = vadd.f32 0.0, %v477
        %v479 = vpop.f32.mrb[0].mxu0
        %480 = vmatprep.mubr.f32.mxu0 0.0
        %481 = vmatmul.mubr.f32.gmra.mrb[0].mxu0 %v326
        %v482 = vpop.f32.mrb[0].mxu0
        %v483 = vadd.f32 0.0, %v482
        %v484 = vpop.f32.mrb[0].mxu0
        %485 = vmatprep.mubr.f32.mxu0 0.0
        %486 = vmatmul.mubr.f32.gmra.mrb[0].mxu0 %v329
        %v487 = vpop.f32.mrb[0].mxu0
        %v488 = vadd.f32 0.0, %v487
        %v489 = vpop.f32.mrb[0].mxu0
        %490 = vmatprep.mubr.f32.mxu0 0.0
        %491 = vmatmul.mubr.f32.gmra.mrb[0].mxu0 %v332
        %v492 = vpop.f32.mrb[0].mxu0
        %v493 = vadd.f32 0.0, %v492
        %v494 = vpop.f32.mrb[0].mxu0
        %495 = vmatprep.mubr.f32.mxu0 0.0
        %496 = vmatmul.mubr.f32.gmra.mrb[0].mxu0 %v335
        %v497 = vpop.f32.mrb[0].mxu0
        %v498 = vadd.f32 0.0, %v497
        %v499 = vpop.f32.mrb[0].mxu0
        %500 = vmatprep.mubr.f32.mxu0 0.0
        %501 = vmatmul.mubr.f32.gmra.mrb[0].mxu0 %v338
        %v502 = vpop.f32.mrb[0].mxu0
        %v503 = vadd.f32 0.0, %v502
        %v504 = vpop.f32.mrb[0].mxu0
        %505 = vmatprep.mubr.f32.mxu0 0.0
        %506 = vmatmul.mubr.f32.gmra.mrb[0].mxu0 %v341
        %v507 = vpop.f32.mrb[0].mxu0
        %v508 = vadd.f32 0.0, %v507
        %v509 = vpop.f32.mrb[0].mxu0
        %510 = vmatprep.mubr.f32.mxu0 0.0
        %511 = vmatmul.mubr.f32.gmra.mrb[0].mxu0 %v344
        %v512 = vpop.f32.mrb[0].mxu0
        %v513 = vadd.f32 0.0, %v512
        %v514 = vpop.f32.mrb[0].mxu0
        %515 = vmatprep.mubr.f32.mxu0 0.0
        %516 = vmatmul.mubr.f32.gmra.mrb[0].mxu0 %v347
        %v517 = vpop.f32.mrb[0].mxu0
        %v518 = vadd.f32 0.0, %v517
        %v519 = vpop.f32.mrb[0].mxu0
        %520 = vmatprep.mubr.f32.mxu0 0.0
        %521 = vmatmul.mubr.f32.gmra.mrb[0].mxu0 %v350
        %v522 = vpop.f32.mrb[0].mxu0
        %v523 = vadd.f32 0.0, %v522
        %v524 = vpop.f32.mrb[0].mxu0
        %525 = vmatprep.mubr.f32.mxu0 0.0
        %526 = vmatmul.mubr.f32.gmra.mrb[0].mxu0 %v353
        %v527 = vpop.f32.mrb[0].mxu0
        %v528 = vadd.f32 0.0, %v527
        %v529 = vpop.f32.mrb[0].mxu0
        %530 = vmatprep.mubr.f32.mxu0 0.0
        %531 = vmatmul.mubr.f32.gmra.mrb[0].mxu0 %v356
        %v532 = vpop.f32.mrb[0].mxu0
        %v533 = vadd.f32 0.0, %v532
        %v534 = vpop.f32.mrb[0].mxu0
        %535 = vmatprep.mubr.f32.mxu0 0.0
        %536 = vmatmul.mubr.f32.gmra.mrb[0].mxu0 %v359
        %v537 = vpop.f32.mrb[0].mxu0
        %v538 = vadd.f32 0.0, %v537
        %v539 = vpop.f32.mrb[0].mxu0
        %540 = vmatprep.mubr.f32.mxu0 0.0
        %541 = vmatmul.mubr.f32.gmra.mrb[0].mxu0 %v362
        %v542 = vpop.f32.mrb[0].mxu0
        %v543 = vadd.f32 0.0, %v542
        %v544 = vpop.f32.mrb[0].mxu0
        %545 = vmatprep.mubr.f32.mxu0 0.0
        %546 = vmatmul.mubr.f32.gmra.mrb[0].mxu0 %v365
        %v547 = vpop.f32.mrb[0].mxu0
        %v548 = vadd.f32 0.0, %v547
        %v549 = vpop.f32.mrb[0].mxu0
        %550 = vmatprep.mubr.f32.mxu0 0.0
        %551 = vmatmul.mubr.f32.gmra.mrb[0].mxu0 %v368
        %v552 = vpop.f32.mrb[0].mxu0
        %v553 = vadd.f32 0.0, %v552
        %v554 = vpop.f32.mrb[0].mxu0
        %555 = vmatprep.mubr.f32.mxu0 0.0
        %556 = vmatmul.mubr.f32.gmra.mrb[0].mxu0 %v371
        %v557 = vpop.f32.mrb[0].mxu0
        %v558 = vadd.f32 0.0, %v557
        %v559 = vpop.f32.mrb[0].mxu0
        %560 = vmatprep.mubr.f32.mxu0 0.0
        %561 = vmatmul.mubr.f32.gmra.mrb[0].mxu0 %v374
        %v562 = vpop.f32.mrb[0].mxu0
        %v563 = vadd.f32 0.0, %v562
        %v564 = vpop.f32.mrb[0].mxu0
        %565 = vmatprep.mubr.f32.mxu0 0.0
        %566 = vmatmul.mubr.f32.gmra.mrb[0].mxu0 %v377
        %v567 = vpop.f32.mrb[0].mxu0
        %v568 = vadd.f32 0.0, %v567
        %v569 = vpop.f32.mrb[0].mxu0
        %570 = vmatprep.mubr.f32.mxu0 0.0
        %571 = vmatmul.mubr.f32.gmra.mrb[0].mxu0 %v380
        %v572 = vpop.f32.mrb[0].mxu0
        %v573 = vadd.f32 0.0, %v572
        %v574 = vpop.f32.mrb[0].mxu0
        %575 = vdwg.mxu0
        %v576 = vld [vmem:[%s2] sm:$0x1]
        %v578 = vlaneseq
        %v579 = vshrl.u32 %v578, 7
        %v580 = vsub.s32 0, %v579
        %v581 = vrot.slane %v576, %v580
        %v583 = vmul.f32 %v453, %v581
        %v584 = vmul.f32 %v458, %v581
        %v585 = vmul.f32 %v463, %v581
        %v586 = vmul.f32 %v468, %v581
        %v587 = vmul.f32 %v473, %v581
        %v588 = vmul.f32 %v478, %v581
        %v589 = vmul.f32 %v483, %v581
        %v590 = vmul.f32 %v488, %v581
        %v591 = vmul.f32 %v493, %v581
        %v592 = vmul.f32 %v498, %v581
        %v593 = vmul.f32 %v503, %v581
        %v594 = vmul.f32 %v508, %v581
        %v595 = vmul.f32 %v513, %v581
        %v596 = vmul.f32 %v518, %v581
        %v597 = vmul.f32 %v523, %v581
        %v598 = vmul.f32 %v528, %v581
        %v599 = vmul.f32 %v533, %v581
        %v600 = vmul.f32 %v538, %v581
        %v601 = vmul.f32 %v543, %v581
        %v602 = vmul.f32 %v548, %v581
        %v603 = vmul.f32 %v553, %v581
        %v604 = vmul.f32 %v558, %v581
        %v605 = vmul.f32 %v563, %v581
        %v606 = vmul.f32 %v568, %v581
        %v607 = vmul.f32 %v573, %v581
        %v608 = vld [vmem:[%s3] sm:$0x1]
        %v610 = vlaneseq
        %v611 = vshrl.u32 %v610, 7
        %v612 = vsub.s32 0, %v611
        %v613 = vrot.slane %v608, %v612
        %v615 = vadd.f32 %v583, %v613
        %v616 = vadd.f32 %v584, %v613
        %v617 = vadd.f32 %v585, %v613
        %v618 = vadd.f32 %v586, %v613
        %v619 = vadd.f32 %v587, %v613
        %v620 = vadd.f32 %v588, %v613
        %v621 = vadd.f32 %v589, %v613
        %v622 = vadd.f32 %v590, %v613
        %v623 = vadd.f32 %v591, %v613
        %v624 = vadd.f32 %v592, %v613
        %v625 = vadd.f32 %v593, %v613
        %v626 = vadd.f32 %v594, %v613
        %v627 = vadd.f32 %v595, %v613
        %v628 = vadd.f32 %v596, %v613
        %v629 = vadd.f32 %v597, %v613
        %v630 = vadd.f32 %v598, %v613
        %v631 = vadd.f32 %v599, %v613
        %v632 = vadd.f32 %v600, %v613
        %v633 = vadd.f32 %v601, %v613
        %v634 = vadd.f32 %v602, %v613
        %v635 = vadd.f32 %v603, %v613
        %v636 = vadd.f32 %v604, %v613
        %v637 = vadd.f32 %v605, %v613
        %v638 = vadd.f32 %v606, %v613
        %v639 = vadd.f32 %v607, %v613
        %v640 = vmax.f32 %v615, 0.0
        %v641 = vmax.f32 %v616, 0.0
        %v642 = vmax.f32 %v617, 0.0
        %v643 = vmax.f32 %v618, 0.0
        %v644 = vmax.f32 %v619, 0.0
        %v645 = vmax.f32 %v620, 0.0
        %v646 = vmax.f32 %v621, 0.0
        %v647 = vmax.f32 %v622, 0.0
        %v648 = vmax.f32 %v623, 0.0
        %v649 = vmax.f32 %v624, 0.0
        %v650 = vmax.f32 %v625, 0.0
        %v651 = vmax.f32 %v626, 0.0
        %v652 = vmax.f32 %v627, 0.0
        %v653 = vmax.f32 %v628, 0.0
        %v654 = vmax.f32 %v629, 0.0
        %v655 = vmax.f32 %v630, 0.0
        %v656 = vmax.f32 %v631, 0.0
        %v657 = vmax.f32 %v632, 0.0
        %v658 = vmax.f32 %v633, 0.0
        %v659 = vmax.f32 %v634, 0.0
        %v660 = vmax.f32 %v635, 0.0
        %v661 = vmax.f32 %v636, 0.0
        %v662 = vmax.f32 %v637, 0.0
        %v663 = vmax.f32 %v638, 0.0
        %v664 = vmax.f32 %v639, 0.0
        %v665 = vadd.f32 %v640, %v641
        %v666 = vadd.f32 %v665, %v642
        %v667 = vadd.f32 %v666, %v643
        %v668 = vadd.f32 %v667, %v644
        %v669 = vadd.f32 %v668, %v645
        %v670 = vadd.f32 %v669, %v646
        %v671 = vadd.f32 %v670, %v647
        %v672 = vadd.f32 %v671, %v648
        %v673 = vadd.f32 %v672, %v649
        %v674 = vadd.f32 %v673, %v650
        %v675 = vadd.f32 %v674, %v651
        %v676 = vadd.f32 %v675, %v652
        %v677 = vadd.f32 %v676, %v653
        %v678 = vadd.f32 %v677, %v654
        %v679 = vadd.f32 %v678, %v655
        %v680 = vadd.f32 %v679, %v656
        %v681 = vadd.f32 %v680, %v657
        %v682 = vadd.f32 %v681, %v658
        %v683 = vadd.f32 %v682, %v659
        %v684 = vadd.f32 %v683, %v660
        %v685 = vadd.f32 %v684, %v661
        %v686 = vadd.f32 %v685, %v662
        %v687 = vadd.f32 %v686, %v663
        %vm688 = vcmask 1043456
        %v689 = vsel %vm688, %v664, 0.0
        %v690 = vadd.f32 %v687, %v689
        %v691 = vrot.slane %v690, 4
        %v692 = vadd.f32 %v690, %v691
        %v693 = vrot.slane %v692, 2
        %v694 = vadd.f32 %v692, %v693
        %v695 = vrot.slane %v694, 1
        %v696 = vadd.f32 %v694, %v695
        %v697 = vrcp.pop 196.0
        %v698 = vmul.f32 %v696, %v697
        %v699 = vld [vmem:[%s4] sm:$0xff]
        %v700 = vld [vmem:[%s4 + $0x8] sm:$0xff]
        %v701 = vld [vmem:[%s4 + $0x10] sm:$0xff]
        %v702 = vld [vmem:[%s4 + $0x18] sm:$0xff]
        %v703 = vld [vmem:[%s4 + $0x20] sm:$0xff]
        %v704 = vld [vmem:[%s4 + $0x28] sm:$0xff]
        %v705 = vld [vmem:[%s4 + $0x30] sm:$0xff]
        %v706 = vld [vmem:[%s4 + $0x38] sm:$0xff]
        %v707 = vld [vmem:[%s4 + $0x40] sm:$0xff]
        %v708 = vld [vmem:[%s4 + $0x48] sm:$0xff]
        %v709 = vld [vmem:[%s4 + $0x50] sm:$0xff]
        %v710 = vld [vmem:[%s4 + $0x58] sm:$0xff]
        %v711 = vld [vmem:[%s4 + $0x60] sm:$0xff]
        %v712 = vld [vmem:[%s4 + $0x68] sm:$0xff]
        %v713 = vld [vmem:[%s4 + $0x70] sm:$0xff]
        %v714 = vld [vmem:[%s4 + $0x78] sm:$0xff]
        %v715 = vld [vmem:[%s5] sm:$0x1]
        %716 = vmatprep.subr.mxu0 0.0
        %717 = vmatpush1.msra.mxu0 %v699
        %718 = vmatprep.subr.mxu0 0.0
        %719 = vmatpush1.msra.mxu0 %v700
        %720 = vmatprep.subr.mxu0 0.0
        %721 = vmatpush1.msra.mxu0 %v701
        %722 = vmatprep.subr.mxu0 0.0
        %723 = vmatpush1.msra.mxu0 %v702
        %724 = vmatprep.subr.mxu0 0.0
        %725 = vmatpush1.msra.mxu0 %v703
        %726 = vmatprep.subr.mxu0 0.0
        %727 = vmatpush1.msra.mxu0 %v704
        %728 = vmatprep.subr.mxu0 0.0
        %729 = vmatpush1.msra.mxu0 %v705
        %730 = vmatprep.subr.mxu0 0.0
        %731 = vmatpush1.msra.mxu0 %v706
        %732 = vmatprep.subr.mxu0 0.0
        %733 = vmatpush1.msra.mxu0 %v707
        %734 = vmatprep.subr.mxu0 0.0
        %735 = vmatpush1.msra.mxu0 %v708
        %736 = vmatprep.subr.mxu0 0.0
        %737 = vmatpush1.msra.mxu0 %v709
        %738 = vmatprep.subr.mxu0 0.0
        %739 = vmatpush1.msra.mxu0 %v710
        %740 = vmatprep.subr.mxu0 0.0
        %741 = vmatpush1.msra.mxu0 %v711
        %742 = vmatprep.subr.mxu0 0.0
        %743 = vmatpush1.msra.mxu0 %v712
        %744 = vmatprep.subr.mxu0 0.0
        %745 = vmatpush1.msra.mxu0 %v713
        %746 = vmatprep.subr.mxu0 0.0
        %747 = vmatpush1.msra.mxu0 %v714
        %748 = vmatprep.subr.mxu0 0.0
        %749 = vmatpush1.msra.mxu0 0.0
        %750 = vmatprep.subr.mxu0 0.0
        %751 = vmatpush1.msra.mxu0 0.0
        %752 = vmatprep.subr.mxu0 0.0
        %753 = vmatpush1.msra.mxu0 0.0
        %754 = vmatprep.subr.mxu0 0.0
        %755 = vmatpush1.msra.mxu0 0.0
        %756 = vmatprep.subr.mxu0 0.0
        %757 = vmatpush1.msra.mxu0 0.0
        %758 = vmatprep.subr.mxu0 0.0
        %759 = vmatpush1.msra.mxu0 0.0
        %760 = vmatprep.subr.mxu0 0.0
        %761 = vmatpush1.msra.mxu0 0.0
        %762 = vmatprep.subr.mxu0 0.0
        %763 = vmatpush1.msra.mxu0 0.0
        %764 = vmatprep.subr.mxu0 0.0
        %765 = vmatpush1.msra.mxu0 0.0
        %766 = vmatprep.subr.mxu0 0.0
        %767 = vmatpush1.msra.mxu0 0.0
        %768 = vmatprep.subr.mxu0 0.0
        %769 = vmatpush1.msra.mxu0 0.0
        %770 = vmatprep.subr.mxu0 0.0
        %771 = vmatpush1.msra.mxu0 0.0
        %772 = vmatprep.subr.mxu0 0.0
        %773 = vmatpush1.msra.mxu0 0.0
        %774 = vmatprep.subr.mxu0 0.0
        %775 = vmatpush1.msra.mxu0 0.0
        %776 = vmatprep.subr.mxu0 0.0
        %777 = vmatpush1.msra.mxu0 0.0
        %778 = vmatprep.subr.mxu0 0.0
        %779 = vmatpush1.msra.mxu0 0.0
        %780 = vmatprep.mubr.f32.mxu0 0.0
        %781 = vmatmul.mubr.f32.gmra.mrb[0].mxu0 %v698
        %v782 = vpop.f32.mrb[0].mxu0
        %v783 = vadd.f32 %v715, %v782
        %v784 = vpop.f32.mrb[0].mxu0
        %785 = vdwg.mxu0
        %v786 = vmax.f32 %v783, 0.0
        %s787 = sld [smem:[#allocation2]]
        %v788 = vlaneseq
        %v789 = vand.u32 %v788, 127
        %s790 = smul.u32 %s22, 64
        %s791 = smul.u32 %s787, 1103515245
        %s792 = sadd.s32 %s790, %s791
        %v793 = vstv %s792
        %v794 = vadd.s32 %v789, %v793
        %v795 = vadd.s32 %v794, 2654435769
        %v796 = vshll.u32 %v795, 13
        %v797 = vxor.u32 %v795, %v796
        %v798 = vshra.s32 %v797, 17
        %v799 = vand.u32 %v798, 32767
        %v800 = vxor.u32 %v797, %v799
        %v801 = vadd.s32 %v800, 1013904223
        %v802 = vshll.u32 %v801, 5
        %v803 = vxor.u32 %v801, %v802
        %v804 = vshra.s32 %v803, 11
        %v805 = vand.u32 %v804, 2097151
        %v806 = vxor.u32 %v803, %v805
        %v807 = vadd.s32 %v806, 374761393
        %v808 = vshll.u32 %v807, 7
        %v809 = vxor.u32 %v807, %v808
        %v810 = vshra.s32 %v809, 15
        %v811 = vand.u32 %v810, 131071
        %v812 = vxor.u32 %v809, %v811
        %vm813 = vcmp.ge.s32.totalorder %v812, 0
        %v814 = vmul.f32 %v786, 2.0
        %v815 = vsel %vm813, %v814, 0.0
        %vm816 = vcmask 516096
        %817 = vst.msk [vmem:[%s271] sm:$0x1] %vm816, %v815
        %s818 = sand.u32 %s182, 1
        %s819 = scalar_lea.sflag [#allocation4], %s818
        %s820 = sand.u32 %s182, 1
        %s821 = scalar_lea.vmem [#allocation3], %s820
        // Predicated region
        $region49: #{cnn_forward.1} parent=47 // pred_check
          %p822 = pneg %p192
        $region50: #{cnn_forward.1} parent=47 // pred_check_branch
          %824 = sbr.rel (%p822) target = $region52
        $region51: #{cnn_forward.1} parent=47 // pred_region
          %s826 = ssub.s32 16, 16
          %827 = vsyncadd %s819, %s826
          %s828 = smul.addr %s22, 16
          %s829 = scalar_lea.hbm %s7, %s828
          %s831 = sshll.u32 %s821, 4
          %s832 = int_to_ptr.vmem [resolvable:$true] %s831
          %834 = dma.vmem_to_hbm [thread:$0]  %s832, 16, %s829, %s819
        $region52: #{cnn_forward.1} parent=47 // pred_fallthru
          _
      $region48: #{cnn_forward.1} parent=5 // pred_fallthru
        _
      %p835 = scmp.le.s32.totalorder 2, %s17
      // Predicated region
      $region53: #{cnn_forward.1} parent=5 // pred_check
        %p836 = pneg %p835
      $region54: #{cnn_forward.1} parent=5 // pred_check_branch
        %838 = sbr.rel (%p836) target = $region56
      $region55: #{cnn_forward.1} parent=5 // pred_region
        %s839 = ssub.s32 %s17, 2
        // Predicated region
        $region57: #{cnn_forward.1} parent=55 // pred_check
          %p840 = pneg %p198
        $region58: #{cnn_forward.1} parent=55 // pred_check_branch
          %842 = sbr.rel (%p840) target = $region60
        $region59: #{cnn_forward.1} parent=55 // pred_region
          %s843 = sand.u32 %s183, 1
          %s844 = scalar_lea.sflag [#allocation4], %s843
          %s845 = sand.u32 %s183, 1
          %s846 = scalar_lea.vmem [#allocation3], %s845
          %847 = dma.done %s844, 16
        $region60: #{cnn_forward.1} parent=55 // pred_fallthru
          _
      $region56: #{cnn_forward.1} parent=5 // pred_fallthru
        _
    $region6: #{cnn_forward.1} parent=1 // loop_footer
      %s21 = sadd.s32 1, %s17
    $region7: #{cnn_forward.1} parent=1 // loop_footer_branch
      %16 = sbr.rel target = $region3
    $region8: #{cnn_forward.1} parent=1 // loop_exit
      _
    %848 = vsyncpa [#allocation4], 1
    %s849 = scalar_lea.sflag [#allocation4], 1
    %850 = vsyncpa %s849, 1

</llo_original>
